<compile_context>
chip_gen: v6e
topology: v6e:2x2x1
jax: 0.10.0
libtpu: 0.0.40
codegen_flags: <defaults>
</compile_context>

<pallas_src>
import functools
from typing import NamedTuple

import jax
import jax.numpy as jnp
from jax.experimental import pallas as pl
from jax.experimental.pallas import tpu as pltpu


def _round_up(a, m):
    return (a + m - 1) // m * m


class GRUParams(NamedTuple):
    wx: jax.Array        # [D,  3*Hp]  columns [r | z | i_n]
    wh: jax.Array        # [Hp, 3*Hp]  columns [r | z | h_n]
    bx: jax.Array        # [1, 3*Hp]   [b_ir+b_hr | b_iz+b_hz | b_in]  (f32)
    bhn: jax.Array       # [1, Hp]     b_hn                            (f32)
    input_size: int
    hidden_size: int
    hidden_pad: int


def prepare_gru_params(w_ih, b_ih, w_hh, b_hh, *, param_dtype=None):
    """One-time parameter preprocessing, hoisted out of the per-step path.

    w_ih : [3H, D], w_hh : [3H, H], b_* : [3H]  (PyTorch nn.Linear layout, gate
    order [reset | update | new]).
    """
    threeH, D = w_ih.shape
    H = threeH // 3
    Hp = _round_up(H, 128)
    dtype = param_dtype if param_dtype is not None else w_ih.dtype

    w_ih_t = w_ih.T                                   # [D, 3H]
    w_hh_t = w_hh.T                                   # [H, 3H]
    w_ir, w_iz, w_in = w_ih_t[:, :H], w_ih_t[:, H:2 * H], w_ih_t[:, 2 * H:]
    w_hr, w_hz, w_hn = w_hh_t[:, :H], w_hh_t[:, H:2 * H], w_hh_t[:, 2 * H:]

    pad_cols = lambda a: jnp.pad(a, ((0, 0), (0, Hp - H)))
    wx = jnp.concatenate([pad_cols(w_ir), pad_cols(w_iz), pad_cols(w_in)],
                         axis=1).astype(dtype)                       # [D, 3*Hp]
    wh = jnp.concatenate([pad_cols(w_hr), pad_cols(w_hz), pad_cols(w_hn)],
                         axis=1)
    wh = jnp.pad(wh, ((0, Hp - H), (0, 0))).astype(dtype)            # [Hp, 3*Hp]

    b_ir, b_iz, b_in = b_ih[:H], b_ih[H:2 * H], b_ih[2 * H:]
    b_hr, b_hz, b_hn = b_hh[:H], b_hh[H:2 * H], b_hh[2 * H:]
    pad_vec = lambda v: jnp.pad(v, (0, Hp - H))
    bx = jnp.concatenate(
        [pad_vec(b_ir + b_hr), pad_vec(b_iz + b_hz), pad_vec(b_in)]
    ).reshape(1, 3 * Hp).astype(jnp.float32)                         # [1, 3*Hp]
    bhn = pad_vec(b_hn).reshape(1, Hp).astype(jnp.float32)           # [1, Hp]

    return GRUParams(wx, wh, bx, bhn, D, H, Hp)


def _gru_gates(x, h_f32, wx_ref, wh_ref, bx_ref, bhn_ref, hp):
    """Shared gate math: two accumulating dots, f32 acc, f32 elementwise."""
    gx = jnp.dot(x.astype(wx_ref.dtype), wx_ref[...],
                 preferred_element_type=jnp.float32) + bx_ref[...]
    gh = jnp.dot(h_f32.astype(wh_ref.dtype), wh_ref[...],
                 preferred_element_type=jnp.float32)
    # Lane-tile-aligned gate slices (hp % 128 == 0).
    rz = jax.nn.sigmoid(gx[:, :2 * hp] + gh[:, :2 * hp])
    r = rz[:, :hp]                                   # reset gate
    z = rz[:, hp:]                                   # update gate
    n = jnp.tanh(gx[:, 2 * hp:] + r * (gh[:, 2 * hp:] + bhn_ref[...]))
    return (h_f32 - n) * z + n


def _gru_step_kernel(x_ref, h_ref, wx_ref, wh_ref, bx_ref, bhn_ref, o_ref, *, hp):
    h = h_ref[...].astype(jnp.float32)
    o_ref[...] = _gru_gates(x_ref[...], h, wx_ref, wh_ref, bx_ref, bhn_ref,
                            hp).astype(o_ref.dtype)


def _gru_seq_kernel(xs_ref, h0_ref, wx_ref, wh_ref, bx_ref, bhn_ref, hs_ref,
                    h_sc, *, hp):
    t = pl.program_id(1)

    @pl.when(t == 0)
    def _():
        h_sc[...] = h0_ref[...].astype(jnp.float32)

    h_new = _gru_gates(xs_ref[0], h_sc[...], wx_ref, wh_ref, bx_ref, bhn_ref, hp)
    h_sc[...] = h_new
    hs_ref[0] = h_new.astype(hs_ref.dtype)


def _choose_tb(B, block_b):
    return min(block_b, _round_up(B, 8))


def gru_cell(x, h, params, *, block_b=128):
    """One GRUCell step.  x: [B, D], h: [B, H] or None (-> zeros)."""
    wx, wh, bx, bhn, D, H, Hp = params
    B = x.shape[0]
    if h is None:
        h = jnp.zeros((B, H), x.dtype)

    tb = _choose_tb(B, block_b)
    Bp = _round_up(B, tb)

    # Minimal per-step glue: batch pad + lane pad of h (no concat, h passed once).
    x_p = jnp.pad(x, ((0, Bp - B), (0, 0)))                    # [Bp, D]
    h_p = jnp.pad(h, ((0, Bp - B), (0, Hp - H)))               # [Bp, Hp]

    out = pl.pallas_call(
        functools.partial(_gru_step_kernel, hp=Hp),
        out_shape=jax.ShapeDtypeStruct((Bp, Hp), x.dtype),
        grid_spec=pltpu.PrefetchScalarGridSpec(
            num_scalar_prefetch=0,
            grid=(Bp // tb,),
            in_specs=[
                pl.BlockSpec((tb, D), lambda i: (i, 0)),           # x  (batch-tiled)
                pl.BlockSpec((tb, Hp), lambda i: (i, 0)),          # h  (batch-tiled)
                pl.BlockSpec((D, 3 * Hp), lambda i: (0, 0)),       # Wx (resident)
                pl.BlockSpec((Hp, 3 * Hp), lambda i: (0, 0)),      # Wh (resident)
                pl.BlockSpec((1, 3 * Hp), lambda i: (0, 0)),       # bx
                pl.BlockSpec((1, Hp), lambda i: (0, 0)),           # b_hn
            ],
            out_specs=pl.BlockSpec((tb, Hp), lambda i: (i, 0)),
        ),
        compiler_params=pltpu.CompilerParams(
            dimension_semantics=("parallel",),
            vmem_limit_bytes=64 * 1024 * 1024,
        ),
    )(x_p, h_p, wx, wh, bx, bhn)

    return out[:B, :H]


def gru_sequence(xs, h0, params, *, block_b=128):
    """T fused GRU steps in one pallas_call.  xs: [T, B, D], h0: [B, H] or None.

    Weights/biases are DMA'd once per sequence (constant index_maps), the hidden
    state lives in an f32 VMEM scratch across the time axis, x streams per step.
    Returns all hidden states hs: [T, B, H].
    """
    wx, wh, bx, bhn, D, H, Hp = params
    T, B, _ = xs.shape
    if h0 is None:
        h0 = jnp.zeros((B, H), xs.dtype)

    tb = _choose_tb(B, block_b)
    Bp = _round_up(B, tb)

    xs_p = jnp.pad(xs, ((0, 0), (0, Bp - B), (0, 0)))          # [T, Bp, D]
    h0_p = jnp.pad(h0, ((0, Bp - B), (0, Hp - H)))             # [Bp, Hp]

    hs = pl.pallas_call(
        functools.partial(_gru_seq_kernel, hp=Hp),
        out_shape=jax.ShapeDtypeStruct((T, Bp, Hp), xs.dtype),
        grid_spec=pltpu.PrefetchScalarGridSpec(
            num_scalar_prefetch=0,
            grid=(Bp // tb, T),                                  # batch outer, time inner
            in_specs=[
                pl.BlockSpec((1, tb, D), lambda b, t: (t, b, 0)),     # x_t  (streamed)
                pl.BlockSpec((tb, Hp), lambda b, t: (b, 0)),          # h0   (per tile)
                pl.BlockSpec((D, 3 * Hp), lambda b, t: (0, 0)),       # Wx   (resident)
                pl.BlockSpec((Hp, 3 * Hp), lambda b, t: (0, 0)),      # Wh   (resident)
                pl.BlockSpec((1, 3 * Hp), lambda b, t: (0, 0)),       # bx
                pl.BlockSpec((1, Hp), lambda b, t: (0, 0)),           # b_hn
            ],
            out_specs=pl.BlockSpec((1, tb, Hp), lambda b, t: (t, b, 0)),
            scratch_shapes=[pltpu.VMEM((tb, Hp), jnp.float32)],       # carried hidden
        ),
        compiler_params=pltpu.CompilerParams(
            dimension_semantics=("parallel", "arbitrary"),
            vmem_limit_bytes=64 * 1024 * 1024,
        ),
    )(xs_p, h0_p, wx, wh, bx, bhn)

    return hs[:, :B, :H]


def reference_gru_cell(x, h, w_ih, b_ih, w_hh, b_hh):
    H = w_hh.shape[1]
    if h is None:
        h = jnp.zeros((x.shape[0], H), x.dtype)
    igates = x @ w_ih.T + b_ih
    hgates = h @ w_hh.T + b_hh
    i_r, i_z, i_n = jnp.split(igates, 3, axis=1)
    h_r, h_z, h_n = jnp.split(hgates, 3, axis=1)
    r = jax.nn.sigmoid(h_r + i_r)
    z = jax.nn.sigmoid(h_z + i_z)
    n = jnp.tanh(i_n + h_n * r)
    return (h - n) * z + n


if __name__ == "__main__":
    input_size = 16
    hidden_size = 32
    batch = 2
    seq_len = 6

    key = jax.random.PRNGKey(0)
    kx, kh, kseq, k1, k2, k3, k4 = jax.random.split(key, 7)

    stdv = 1.0 / hidden_size ** 0.5
    # Deterministic init matching nn.init.uniform_(-stdv, stdv).
    w_ih = jax.random.uniform(k1, (3 * hidden_size, input_size), jnp.float32, -stdv, stdv)
    b_ih = jax.random.uniform(k2, (3 * hidden_size,), jnp.float32, -stdv, stdv)
    w_hh = jax.random.uniform(k3, (3 * hidden_size, hidden_size), jnp.float32, -stdv, stdv)
    b_hh = jax.random.uniform(k4, (3 * hidden_size,), jnp.float32, -stdv, stdv)

    # One-time parameter prep (transpose / split / pad) -- out of the step path.
    # Pass param_dtype=jnp.bfloat16 here for bf16 MXU weights on v5e/v6e/v7x.
    params = prepare_gru_params(w_ih, b_ih, w_hh, b_hh)

    x = jax.random.normal(kx, (batch, input_size), jnp.float32)
    h = jax.random.normal(kh, (batch, hidden_size), jnp.float32)

    # Case 1: forward() with hidden=None -> zeros hidden state.
    out0 = jax.block_until_ready(gru_cell(x, None, params))
    ref0 = reference_gru_cell(x, None, w_ih, b_ih, w_hh, b_hh)
    assert out0.shape == (batch, hidden_size)
    assert jnp.allclose(out0, ref0, atol=1e-4, rtol=1e-4), "mismatch (hidden=None)"

    # Case 2: nonzero hidden state.
    out1 = jax.block_until_ready(gru_cell(x, h, params))
    ref1 = reference_gru_cell(x, h, w_ih, b_ih, w_hh, b_hh)
    assert jnp.allclose(out1, ref1, atol=1e-4, rtol=1e-4), "mismatch (hidden given)"

    # Case 3: fused multi-timestep kernel vs per-step reference loop.
    xs = jax.random.normal(kseq, (seq_len, batch, input_size), jnp.float32)
    hs = jax.block_until_ready(gru_sequence(xs, h, params))
    h_ref = h
    refs = []
    for t in range(seq_len):
        h_ref = reference_gru_cell(xs[t], h_ref, w_ih, b_ih, w_hh, b_hh)
        refs.append(h_ref)
    refs = jnp.stack(refs)
    assert hs.shape == (seq_len, batch, hidden_size)
    assert jnp.allclose(hs, refs, atol=1e-4, rtol=1e-4), "mismatch (sequence)"

    print("KERNEL_OK")
</pallas_src>

<mosaic_0001>
module attributes {stable_mosaic.version = 11 : i64} {
  func.func @_gru_step_kernel(%arg0: i32, %arg1: memref<8x16xf32, #tpu.memory_space<vmem>>, %arg2: memref<8x128xf32, #tpu.memory_space<vmem>>, %arg3: memref<16x384xf32, #tpu.memory_space<vmem>>, %arg4: memref<128x384xf32, #tpu.memory_space<vmem>>, %arg5: memref<1x384xf32, #tpu.memory_space<vmem>>, %arg6: memref<1x128xf32, #tpu.memory_space<vmem>>, %arg7: memref<8x128xf32, #tpu.memory_space<vmem>>) attributes {dimension_semantics = [#tpu.dimension_semantics<parallel>], iteration_bounds = array<i64: 1>, scalar_prefetch = 0 : i64, scratch_operands = 0 : i64, tpu.core_type = #tpu.core_type<tc>, window_params = [{transform_indices = @transform_0, window_bounds = array<i64: 8, 16>}, {transform_indices = @transform_1, window_bounds = array<i64: 8, 128>}, {pipeline_mode = #tpu.pipeline_mode<synchronous>, transform_indices = @transform_2, window_bounds = array<i64: 16, 384>}, {pipeline_mode = #tpu.pipeline_mode<synchronous>, transform_indices = @transform_3, window_bounds = array<i64: 128, 384>}, {pipeline_mode = #tpu.pipeline_mode<synchronous>, transform_indices = @transform_4, window_bounds = array<i64: 1, 384>}, {pipeline_mode = #tpu.pipeline_mode<synchronous>, transform_indices = @transform_5, window_bounds = array<i64: 1, 128>}, {transform_indices = @transform_6, window_bounds = array<i64: 8, 128>}]} {
    %c0 = arith.constant 0 : index
    %c0_0 = arith.constant 0 : index
    %0 = vector.load %arg2[%c0, %c0_0] : memref<8x128xf32, #tpu.memory_space<vmem>>, vector<8x128xf32>
    %c0_1 = arith.constant 0 : index
    %c0_2 = arith.constant 0 : index
    %1 = vector.load %arg1[%c0_1, %c0_2] : memref<8x16xf32, #tpu.memory_space<vmem>>, vector<8x16xf32>
    %c0_3 = arith.constant 0 : index
    %c0_4 = arith.constant 0 : index
    %2 = vector.load %arg3[%c0_3, %c0_4] : memref<16x384xf32, #tpu.memory_space<vmem>>, vector<16x384xf32>
    %cst = arith.constant dense<0.000000e+00> : vector<8x384xf32>
    %3 = tpu.matmul %1, %2, %cst {dimension_numbers = #tpu.dot_dimension_numbers<[1], [0], [0], [1], [0, 0, 1, 1], [], []>} : vector<8x16xf32>, vector<16x384xf32>, vector<8x384xf32> -> vector<8x384xf32>
    %c0_5 = arith.constant 0 : index
    %c0_6 = arith.constant 0 : index
    %4 = vector.load %arg5[%c0_5, %c0_6] : memref<1x384xf32, #tpu.memory_space<vmem>>, vector<1x384xf32>
    %5 = vector.broadcast %4 : vector<1x384xf32> to vector<8x384xf32>
    %6 = arith.addf %3, %5 : vector<8x384xf32>
    %c0_7 = arith.constant 0 : index
    %c0_8 = arith.constant 0 : index
    %7 = vector.load %arg4[%c0_7, %c0_8] : memref<128x384xf32, #tpu.memory_space<vmem>>, vector<128x384xf32>
    %cst_9 = arith.constant dense<0.000000e+00> : vector<8x384xf32>
    %8 = tpu.matmul %0, %7, %cst_9 {dimension_numbers = #tpu.dot_dimension_numbers<[1], [0], [0], [1], [0, 0, 1, 1], [], []>} : vector<8x128xf32>, vector<128x384xf32>, vector<8x384xf32> -> vector<8x384xf32>
    %9 = vector.extract_strided_slice %6 {offsets = [0, 0], sizes = [8, 256], strides = [1, 1]} : vector<8x384xf32> to vector<8x256xf32>
    %10 = vector.extract_strided_slice %8 {offsets = [0, 0], sizes = [8, 256], strides = [1, 1]} : vector<8x384xf32> to vector<8x256xf32>
    %11 = arith.addf %9, %10 : vector<8x256xf32>
    %12 = arith.negf %11 : vector<8x256xf32>
    %13 = math.exp %12 : vector<8x256xf32>
    %cst_10 = arith.constant 1.000000e+00 : f32
    %14 = vector.broadcast %cst_10 : f32 to vector<8x256xf32>
    %15 = arith.addf %14, %13 : vector<8x256xf32>
    %16 = arith.divf %14, %15 : vector<8x256xf32>
    %17 = vector.extract_strided_slice %16 {offsets = [0, 0], sizes = [8, 128], strides = [1, 1]} : vector<8x256xf32> to vector<8x128xf32>
    %18 = vector.extract_strided_slice %16 {offsets = [0, 128], sizes = [8, 128], strides = [1, 1]} : vector<8x256xf32> to vector<8x128xf32>
    %19 = vector.extract_strided_slice %6 {offsets = [0, 256], sizes = [8, 128], strides = [1, 1]} : vector<8x384xf32> to vector<8x128xf32>
    %20 = vector.extract_strided_slice %8 {offsets = [0, 256], sizes = [8, 128], strides = [1, 1]} : vector<8x384xf32> to vector<8x128xf32>
    %c0_11 = arith.constant 0 : index
    %c0_12 = arith.constant 0 : index
    %21 = vector.load %arg6[%c0_11, %c0_12] : memref<1x128xf32, #tpu.memory_space<vmem>>, vector<1x128xf32>
    %22 = vector.broadcast %21 : vector<1x128xf32> to vector<8x128xf32>
    %23 = arith.addf %20, %22 : vector<8x128xf32>
    %24 = arith.mulf %17, %23 : vector<8x128xf32>
    %25 = arith.addf %19, %24 : vector<8x128xf32>
    %26 = math.tanh %25 : vector<8x128xf32>
    %27 = arith.subf %0, %26 : vector<8x128xf32>
    %28 = arith.mulf %27, %18 : vector<8x128xf32>
    %29 = arith.addf %28, %26 : vector<8x128xf32>
    %c0_13 = arith.constant 0 : index
    %c0_14 = arith.constant 0 : index
    %30 = vector.load %arg7[%c0_13, %c0_14] : memref<8x128xf32, #tpu.memory_space<vmem>>, vector<8x128xf32>
    tpu.vector_store %arg7[%c0_13, %c0_14], %29 {strides = array<i32>} : memref<8x128xf32, #tpu.memory_space<vmem>>, vector<8x128xf32>,
    return
  }
  func.func @transform_0(%arg0: i32) -> (i32, i32) {
    %c0_i32 = arith.constant 0 : i32
    %c0_i32_0 = arith.constant 0 : i32
    return %arg0, %c0_i32 : i32, i32
  }
  func.func @transform_1(%arg0: i32) -> (i32, i32) {
    %c0_i32 = arith.constant 0 : i32
    %c0_i32_0 = arith.constant 0 : i32
    return %arg0, %c0_i32 : i32, i32
  }
  func.func @transform_2(%arg0: i32) -> (i32, i32) {
    %c0_i32 = arith.constant 0 : i32
    %c0_i32_0 = arith.constant 0 : i32
    %c0_i32_1 = arith.constant 0 : i32
    return %c0_i32, %c0_i32_0 : i32, i32
  }
  func.func @transform_3(%arg0: i32) -> (i32, i32) {
    %c0_i32 = arith.constant 0 : i32
    %c0_i32_0 = arith.constant 0 : i32
    %c0_i32_1 = arith.constant 0 : i32
    return %c0_i32, %c0_i32_0 : i32, i32
  }
  func.func @transform_4(%arg0: i32) -> (i32, i32) {
    %c0_i32 = arith.constant 0 : i32
    %c0_i32_0 = arith.constant 0 : i32
    %c0_i32_1 = arith.constant 0 : i32
    return %c0_i32, %c0_i32_0 : i32, i32
  }
  func.func @transform_5(%arg0: i32) -> (i32, i32) {
    %c0_i32 = arith.constant 0 : i32
    %c0_i32_0 = arith.constant 0 : i32
    %c0_i32_1 = arith.constant 0 : i32
    return %c0_i32, %c0_i32_0 : i32, i32
  }
  func.func @transform_6(%arg0: i32) -> (i32, i32) {
    %c0_i32 = arith.constant 0 : i32
    %c0_i32_0 = arith.constant 0 : i32
    return %arg0, %c0_i32 : i32, i32
  }
}

</mosaic_0001>

<llo_original>
// kernel: tpu_custom_call.1
$region0: #{tpu_custom_call.1}
  #allocation0 [shape = 'u32[]', space=smem, size = 0x4, offset = 0x4, fixed_abs, tag = 'smem constant byte address 0x4 - core index']
  #allocation1 [shape = 'u32[144,128]{1,0:T(1,128)}', space=vmem, size = 0x12000, scoped, tag = 'internal scratch']
  %s0 = inlined_call_operand.hbm [shape: f32[8,16], index: 0, kind: input, shape index: {}]
  %s1 = inlined_call_operand.hbm [shape: f32[8,128], index: 1, kind: input, shape index: {}]
  %s2 = inlined_call_operand.hbm [shape: f32[16,384], index: 2, kind: input, shape index: {}]
  %s3 = inlined_call_operand.hbm [shape: f32[128,384], index: 3, kind: input, shape index: {}]
  %s4 = inlined_call_operand.vmem [shape: f32[1,384], index: 4, kind: input, shape index: {}]
  %s5 = inlined_call_operand.vmem [shape: f32[1,128], index: 5, kind: input, shape index: {}]
  %s6 = inlined_call_operand.hbm [shape: f32[8,128], index: 6, kind: output, shape index: {}]
  %s7 = sld [smem:[#allocation0]]
  $region50: #{tpu_custom_call.1} parent=0
    _
  %s9 = ssub.s32 1, %s7
  %s10 = scalar_select 0, %s9, %s7
  $region1: #{tpu_custom_call.1} parent=0
    #allocation2 [shape = 'u8[4096]{0}', space=vmem, size = 0x1000, scoped, tag = 'input window, operand 0, single buffered']
    #allocation3 [shape = 's32[1]{0}', space=sflag, size = 0x4, scoped, tag = 'scoped memory for tpu_custom_call.1']
    #allocation4 [shape = 's32[1]{0}', space=sflag, size = 0x4, scoped, tag = 'scoped memory for tpu_custom_call.1']
    #allocation5 [shape = 'u8[4096]{0}', space=vmem, size = 0x1000, scoped, tag = 'input window, operand 1, single buffered']
    #allocation6 [shape = 's32[1]{0}', space=sflag, size = 0x4, scoped, tag = 'scoped memory for tpu_custom_call.1']
    #allocation7 [shape = 'u8[24576]{0}', space=vmem, size = 0x6000, scoped, tag = 'input window, operand 2, single buffered']
    #allocation8 [shape = 'u8[196608]{0}', space=vmem, size = 0x30000, scoped, tag = 'input window, operand 3, single buffered']
    #allocation9 [shape = 's32[1]{0}', space=sflag, size = 0x4, scoped, tag = 'scoped memory for tpu_custom_call.1']
    #allocation10 [shape = 'u8[4096]{0}', space=vmem, size = 0x1000, scoped, tag = 'output window, operand 0, single buffered']
    %11 = vsyncpa [#allocation3], 0
    %12 = vsyncpa [#allocation6], 0
    %13 = vsyncpa [#allocation9], 0
    %14 = vsyncpa [#allocation4], 0
    // Predicated region
    $region2: #{tpu_custom_call.1} parent=1 // pred_check
      _
    $region3: #{tpu_custom_call.1} parent=1 // pred_check_branch
      %16 = sbr.rel (0) target = $region5
    $region4: #{tpu_custom_call.1} parent=1 // pred_region
      %s18 = ssub.s32 128, 128
      %19 = vsyncadd [#allocation3], %s18
      %s21 = sshll.u32 [#allocation2], 4
      %s22 = int_to_ptr.vmem [resolvable:$true] %s21
      %24 = dma.hbm_to_vmem [thread:$0]  %s0, 128, %s22, [#allocation3]
    $region5: #{tpu_custom_call.1} parent=1 // pred_fallthru
      _
    // Predicated region
    $region6: #{tpu_custom_call.1} parent=1 // pred_check
      _
    $region7: #{tpu_custom_call.1} parent=1 // pred_check_branch
      %26 = sbr.rel (0) target = $region9
    $region8: #{tpu_custom_call.1} parent=1 // pred_region
      %s28 = ssub.s32 128, 128
      %29 = vsyncadd [#allocation6], %s28
      %s31 = sshll.u32 [#allocation5], 4
      %s32 = int_to_ptr.vmem [resolvable:$true] %s31
      %34 = dma.hbm_to_vmem [thread:$0]  %s1, 128, %s32, [#allocation6]
    $region9: #{tpu_custom_call.1} parent=1 // pred_fallthru
      _
    // Predicated region
    $region10: #{tpu_custom_call.1} parent=1 // pred_check
      _
    $region11: #{tpu_custom_call.1} parent=1 // pred_check_branch
      %36 = sbr.rel (0) target = $region13
    $region12: #{tpu_custom_call.1} parent=1 // pred_region
      %s38 = ssub.s32 768, 768
      %39 = vsyncadd [#allocation6], %s38
      %s40 = sshll.u32 [#allocation7], 4
      %s41 = int_to_ptr.vmem [resolvable:$true] %s40
      %46 = dma.hbm_to_vmem [thread:$0]  %s2, 768, %s41, [#allocation6], 384, 384, 24
    $region13: #{tpu_custom_call.1} parent=1 // pred_fallthru
      _
    // Predicated region
    $region14: #{tpu_custom_call.1} parent=1 // pred_check
      _
    $region15: #{tpu_custom_call.1} parent=1 // pred_check_branch
      %48 = sbr.rel (0) target = $region17
    $region16: #{tpu_custom_call.1} parent=1 // pred_region
      %s50 = ssub.s32 6144, 6144
      %51 = vsyncadd [#allocation9], %s50
      %s52 = sshll.u32 [#allocation8], 4
      %s53 = int_to_ptr.vmem [resolvable:$true] %s52
      %58 = dma.hbm_to_vmem [thread:$0]  %s3, 6144, %s53, [#allocation9], 384, 384, 24
    $region17: #{tpu_custom_call.1} parent=1 // pred_fallthru
      _
    // Predicated region
    $region18: #{tpu_custom_call.1} parent=1 // pred_check
      _
    $region19: #{tpu_custom_call.1} parent=1 // pred_check_branch
      %60 = sbr.rel (0) target = $region21
    $region20: #{tpu_custom_call.1} parent=1 // pred_region
      _
    $region21: #{tpu_custom_call.1} parent=1 // pred_fallthru
      _
    // Predicated region
    $region22: #{tpu_custom_call.1} parent=1 // pred_check
      _
    $region23: #{tpu_custom_call.1} parent=1 // pred_check_branch
      %62 = sbr.rel (0) target = $region25
    $region24: #{tpu_custom_call.1} parent=1 // pred_region
      _
    $region25: #{tpu_custom_call.1} parent=1 // pred_fallthru
      _
    // Predicated region
    $region26: #{tpu_custom_call.1} parent=1 // pred_check
      _
    $region27: #{tpu_custom_call.1} parent=1 // pred_check_branch
      %64 = sbr.rel (0) target = $region29
    $region28: #{tpu_custom_call.1} parent=1 // pred_region
      %65 = dma.done [#allocation3], 128
    $region29: #{tpu_custom_call.1} parent=1 // pred_fallthru
      _
    // Predicated region
    $region30: #{tpu_custom_call.1} parent=1 // pred_check
      _
    $region31: #{tpu_custom_call.1} parent=1 // pred_check_branch
      %67 = sbr.rel (0) target = $region33
    $region32: #{tpu_custom_call.1} parent=1 // pred_region
      %68 = dma.done [#allocation6], 128
    $region33: #{tpu_custom_call.1} parent=1 // pred_fallthru
      _
    // Predicated region
    $region34: #{tpu_custom_call.1} parent=1 // pred_check
      _
    $region35: #{tpu_custom_call.1} parent=1 // pred_check_branch
      %70 = sbr.rel (0) target = $region37
    $region36: #{tpu_custom_call.1} parent=1 // pred_region
      %71 = dma.done [#allocation6], 768
    $region37: #{tpu_custom_call.1} parent=1 // pred_fallthru
      _
    // Predicated region
    $region38: #{tpu_custom_call.1} parent=1 // pred_check
      _
    $region39: #{tpu_custom_call.1} parent=1 // pred_check_branch
      %73 = sbr.rel (0) target = $region41
    $region40: #{tpu_custom_call.1} parent=1 // pred_region
      %74 = dma.done [#allocation9], 6144
    $region41: #{tpu_custom_call.1} parent=1 // pred_fallthru
      _
    %v75 = vld [vmem:[#allocation5] sm:$0xff]
    %v76 = vld [vmem:[#allocation2] sm:$0xff]
    %v77 = vld [vmem:[#allocation7] sm:$0xff]
    %v78 = vld [vmem:[#allocation7 + $0x8] sm:$0xff]
    %v79 = vld [vmem:[#allocation7 + $0x10] sm:$0xff]
    %v80 = vld [vmem:[#allocation7 + $0x18] sm:$0xff]
    %v81 = vld [vmem:[#allocation7 + $0x20] sm:$0xff]
    %v82 = vld [vmem:[#allocation7 + $0x28] sm:$0xff]
    %v83 = vld [vmem:[%s4] sm:$0x7]
    %v85 = vlaneseq
    %v86 = vshrl.u32 %v85, 7
    %v87 = vsub.s32 0, %v86
    %v88 = vrot.slane %v83, %v87
    %v89 = vlaneseq
    %v90 = vshrl.u32 %v89, 7
    %v91 = vsub.s32 1, %v90
    %v92 = vrot.slane %v83, %v91
    %v93 = vlaneseq
    %v94 = vshrl.u32 %v93, 7
    %v95 = vsub.s32 2, %v94
    %v96 = vrot.slane %v83, %v95
    %vm100 = vcmask 130048
    %v102 = vsel %vm100, %v76, 0
    %104 = vmatprep.subr.mxu0 0.0
    %105 = vmatpush1.msra.mxu0 0.0
    %106 = vmatprep.subr.mxu0 0.0
    %107 = vmatpush1.msra.mxu0 0.0
    %108 = vmatprep.subr.mxu0 0.0
    %109 = vmatpush1.msra.mxu0 0.0
    %110 = vmatprep.subr.mxu0 0.0
    %111 = vmatpush1.msra.mxu0 0.0
    %112 = vmatprep.subr.mxu0 0.0
    %113 = vmatpush1.msra.mxu0 0.0
    %114 = vmatprep.subr.mxu0 0.0
    %115 = vmatpush1.msra.mxu0 0.0
    %116 = vmatprep.subr.mxu0 0.0
    %117 = vmatpush1.msra.mxu0 0.0
    %118 = vmatprep.subr.mxu0 0.0
    %119 = vmatpush1.msra.mxu0 0.0
    %120 = vmatprep.subr.mxu0 0.0
    %121 = vmatpush1.msra.mxu0 0.0
    %122 = vmatprep.subr.mxu0 0.0
    %123 = vmatpush1.msra.mxu0 0.0
    %124 = vmatprep.subr.mxu0 0.0
    %125 = vmatpush1.msra.mxu0 0.0
    %126 = vmatprep.subr.mxu0 0.0
    %127 = vmatpush1.msra.mxu0 0.0
    %128 = vmatprep.subr.mxu0 0.0
    %129 = vmatpush1.msra.mxu0 0.0
    %130 = vmatprep.subr.mxu0 0.0
    %131 = vmatpush1.msra.mxu0 0.0
    %132 = vmatprep.subr.mxu0 %v81
    %133 = vmatpush1.msra.mxu0 %v80
    %134 = vmatprep.subr.mxu0 %v78
    %135 = vmatpush1.msra.mxu0 %v77
    %136 = vmatprep.subr.mxu0 0.0
    %137 = vmatpush2.msra.mxu0 0.0
    %138 = vmatprep.subr.mxu0 0.0
    %139 = vmatpush2.msra.mxu0 0.0
    %140 = vmatprep.subr.mxu0 0.0
    %141 = vmatpush2.msra.mxu0 0.0
    %142 = vmatprep.subr.mxu0 0.0
    %143 = vmatpush2.msra.mxu0 0.0
    %144 = vmatprep.subr.mxu0 0.0
    %145 = vmatpush2.msra.mxu0 0.0
    %146 = vmatprep.subr.mxu0 0.0
    %147 = vmatpush2.msra.mxu0 0.0
    %148 = vmatprep.subr.mxu0 0.0
    %149 = vmatpush2.msra.mxu0 0.0
    %150 = vmatprep.subr.mxu0 0.0
    %151 = vmatpush2.msra.mxu0 0.0
    %152 = vmatprep.subr.mxu0 0.0
    %153 = vmatpush2.msra.mxu0 0.0
    %154 = vmatprep.subr.mxu0 0.0
    %155 = vmatpush2.msra.mxu0 0.0
    %156 = vmatprep.subr.mxu0 0.0
    %157 = vmatpush2.msra.mxu0 0.0
    %158 = vmatprep.subr.mxu0 0.0
    %159 = vmatpush2.msra.mxu0 0.0
    %160 = vmatprep.subr.mxu0 0.0
    %161 = vmatpush2.msra.mxu0 0.0
    %162 = vmatprep.subr.mxu0 0.0
    %163 = vmatpush2.msra.mxu0 0.0
    %164 = vmatprep.subr.mxu0 0.0
    %165 = vmatpush2.msra.mxu0 0.0
    %166 = vmatprep.subr.mxu0 0.0
    %167 = vmatpush2.msra.mxu0 0.0
    %168 = vmatprep.mubr.f32.mxu0 0.0
    %169 = vmatmul.mubr.f32.gmra.mxu0 %v102
    %v170 = vpop.f32.mrf.mxu0
    %v171 = vadd.f32 %v88, %v170
    %v172 = vpop.f32.mrf.mxu0
    %v173 = vadd.f32 %v92, %v172
    %174 = vdwg.mxu0
    %175 = vmatprep.subr.mxu0 0.0
    %176 = vmatpush1.msra.mxu0 0.0
    %177 = vmatprep.subr.mxu0 0.0
    %178 = vmatpush1.msra.mxu0 0.0
    %179 = vmatprep.subr.mxu0 0.0
    %180 = vmatpush1.msra.mxu0 0.0
    %181 = vmatprep.subr.mxu0 0.0
    %182 = vmatpush1.msra.mxu0 0.0
    %183 = vmatprep.subr.mxu0 0.0
    %184 = vmatpush1.msra.mxu0 0.0
    %185 = vmatprep.subr.mxu0 0.0
    %186 = vmatpush1.msra.mxu0 0.0
    %187 = vmatprep.subr.mxu0 0.0
    %188 = vmatpush1.msra.mxu0 0.0
    %189 = vmatprep.subr.mxu0 0.0
    %190 = vmatpush1.msra.mxu0 0.0
    %191 = vmatprep.subr.mxu0 0.0
    %192 = vmatpush1.msra.mxu0 0.0
    %193 = vmatprep.subr.mxu0 0.0
    %194 = vmatpush1.msra.mxu0 0.0
    %195 = vmatprep.subr.mxu0 0.0
    %196 = vmatpush1.msra.mxu0 0.0
    %197 = vmatprep.subr.mxu0 0.0
    %198 = vmatpush1.msra.mxu0 0.0
    %199 = vmatprep.subr.mxu0 0.0
    %200 = vmatpush1.msra.mxu0 0.0
    %201 = vmatprep.subr.mxu0 0.0
    %202 = vmatpush1.msra.mxu0 0.0
    %203 = vmatprep.subr.mxu0 0.0
    %204 = vmatpush1.msra.mxu0 %v82
    %205 = vmatprep.subr.mxu0 0.0
    %206 = vmatpush1.msra.mxu0 %v79
    %207 = vmatprep.subr.mxu0 0.0
    %208 = vmatpush2.msra.mxu0 0.0
    %209 = vmatprep.subr.mxu0 0.0
    %210 = vmatpush2.msra.mxu0 0.0
    %211 = vmatprep.subr.mxu0 0.0
    %212 = vmatpush2.msra.mxu0 0.0
    %213 = vmatprep.subr.mxu0 0.0
    %214 = vmatpush2.msra.mxu0 0.0
    %215 = vmatprep.subr.mxu0 0.0
    %216 = vmatpush2.msra.mxu0 0.0
    %217 = vmatprep.subr.mxu0 0.0
    %218 = vmatpush2.msra.mxu0 0.0
    %219 = vmatprep.subr.mxu0 0.0
    %220 = vmatpush2.msra.mxu0 0.0
    %221 = vmatprep.subr.mxu0 0.0
    %222 = vmatpush2.msra.mxu0 0.0
    %223 = vmatprep.subr.mxu0 0.0
    %224 = vmatpush2.msra.mxu0 0.0
    %225 = vmatprep.subr.mxu0 0.0
    %226 = vmatpush2.msra.mxu0 0.0
    %227 = vmatprep.subr.mxu0 0.0
    %228 = vmatpush2.msra.mxu0 0.0
    %229 = vmatprep.subr.mxu0 0.0
    %230 = vmatpush2.msra.mxu0 0.0
    %231 = vmatprep.subr.mxu0 0.0
    %232 = vmatpush2.msra.mxu0 0.0
    %233 = vmatprep.subr.mxu0 0.0
    %234 = vmatpush2.msra.mxu0 0.0
    %235 = vmatprep.subr.mxu0 0.0
    %236 = vmatpush2.msra.mxu0 0.0
    %237 = vmatprep.subr.mxu0 0.0
    %238 = vmatpush2.msra.mxu0 0.0
    %239 = vmatprep.mubr.f32.mxu0 0.0
    %240 = vmatmul.mubr.f32.gmra.mxu0 %v102
    %v241 = vpop.f32.mrf.mxu0
    %v242 = vadd.f32 %v96, %v241
    %v243 = vpop.f32.mrf.mxu0
    %244 = vdwg.mxu0
    %v245 = vld [vmem:[#allocation8] sm:$0xff]
    %v246 = vld [vmem:[#allocation8 + $0x8] sm:$0xff]
    %v247 = vld [vmem:[#allocation8 + $0x10] sm:$0xff]
    %v248 = vld [vmem:[#allocation8 + $0x18] sm:$0xff]
    %v249 = vld [vmem:[#allocation8 + $0x20] sm:$0xff]
    %v250 = vld [vmem:[#allocation8 + $0x28] sm:$0xff]
    %v251 = vld [vmem:[#allocation8 + $0x30] sm:$0xff]
    %v252 = vld [vmem:[#allocation8 + $0x38] sm:$0xff]
    %v253 = vld [vmem:[#allocation8 + $0x40] sm:$0xff]
    %v254 = vld [vmem:[#allocation8 + $0x48] sm:$0xff]
    %v255 = vld [vmem:[#allocation8 + $0x50] sm:$0xff]
    %v256 = vld [vmem:[#allocation8 + $0x58] sm:$0xff]
    %v257 = vld [vmem:[#allocation8 + $0x60] sm:$0xff]
    %v258 = vld [vmem:[#allocation8 + $0x68] sm:$0xff]
    %v259 = vld [vmem:[#allocation8 + $0x70] sm:$0xff]
    %v260 = vld [vmem:[#allocation8 + $0x78] sm:$0xff]
    %v261 = vld [vmem:[#allocation8 + $0x80] sm:$0xff]
    %v262 = vld [vmem:[#allocation8 + $0x88] sm:$0xff]
    %v263 = vld [vmem:[#allocation8 + $0x90] sm:$0xff]
    %v264 = vld [vmem:[#allocation8 + $0x98] sm:$0xff]
    %v265 = vld [vmem:[#allocation8 + $0xa0] sm:$0xff]
    %v266 = vld [vmem:[#allocation8 + $0xa8] sm:$0xff]
    %v267 = vld [vmem:[#allocation8 + $0xb0] sm:$0xff]
    %v268 = vld [vmem:[#allocation8 + $0xb8] sm:$0xff]
    %v269 = vld [vmem:[#allocation8 + $0xc0] sm:$0xff]
    %v270 = vld [vmem:[#allocation8 + $0xc8] sm:$0xff]
    %v271 = vld [vmem:[#allocation8 + $0xd0] sm:$0xff]
    %v272 = vld [vmem:[#allocation8 + $0xd8] sm:$0xff]
    %v273 = vld [vmem:[#allocation8 + $0xe0] sm:$0xff]
    %v274 = vld [vmem:[#allocation8 + $0xe8] sm:$0xff]
    %v275 = vld [vmem:[#allocation8 + $0xf0] sm:$0xff]
    %v276 = vld [vmem:[#allocation8 + $0xf8] sm:$0xff]
    %v277 = vld [vmem:[#allocation8 + $0x100] sm:$0xff]
    %v278 = vld [vmem:[#allocation8 + $0x108] sm:$0xff]
    %v279 = vld [vmem:[#allocation8 + $0x110] sm:$0xff]
    %v280 = vld [vmem:[#allocation8 + $0x118] sm:$0xff]
    %v281 = vld [vmem:[#allocation8 + $0x120] sm:$0xff]
    %v282 = vld [vmem:[#allocation8 + $0x128] sm:$0xff]
    %v283 = vld [vmem:[#allocation8 + $0x130] sm:$0xff]
    %v284 = vld [vmem:[#allocation8 + $0x138] sm:$0xff]
    %v285 = vld [vmem:[#allocation8 + $0x140] sm:$0xff]
    %v286 = vld [vmem:[#allocation8 + $0x148] sm:$0xff]
    %v287 = vld [vmem:[#allocation8 + $0x150] sm:$0xff]
    %v288 = vld [vmem:[#allocation8 + $0x158] sm:$0xff]
    %v289 = vld [vmem:[#allocation8 + $0x160] sm:$0xff]
    %v290 = vld [vmem:[#allocation8 + $0x168] sm:$0xff]
    %v291 = vld [vmem:[#allocation8 + $0x170] sm:$0xff]
    %v292 = vld [vmem:[#allocation8 + $0x178] sm:$0xff]
    %293 = vmatprep.subr.mxu0 %v291
    %294 = vmatpush1.msra.mxu0 %v290
    %295 = vmatprep.subr.mxu0 %v288
    %296 = vmatpush1.msra.mxu0 %v287
    %297 = vmatprep.subr.mxu0 %v285
    %298 = vmatpush1.msra.mxu0 %v284
    %299 = vmatprep.subr.mxu0 %v282
    %300 = vmatpush1.msra.mxu0 %v281
    %301 = vmatprep.subr.mxu0 %v279
    %302 = vmatpush1.msra.mxu0 %v278
    %303 = vmatprep.subr.mxu0 %v276
    %304 = vmatpush1.msra.mxu0 %v275
    %305 = vmatprep.subr.mxu0 %v273
    %306 = vmatpush1.msra.mxu0 %v272
    %307 = vmatprep.subr.mxu0 %v270
    %308 = vmatpush1.msra.mxu0 %v269
    %309 = vmatprep.subr.mxu0 %v267
    %310 = vmatpush1.msra.mxu0 %v266
    %311 = vmatprep.subr.mxu0 %v264
    %312 = vmatpush1.msra.mxu0 %v263
    %313 = vmatprep.subr.mxu0 %v261
    %314 = vmatpush1.msra.mxu0 %v260
    %315 = vmatprep.subr.mxu0 %v258
    %316 = vmatpush1.msra.mxu0 %v257
    %317 = vmatprep.subr.mxu0 %v255
    %318 = vmatpush1.msra.mxu0 %v254
    %319 = vmatprep.subr.mxu0 %v252
    %320 = vmatpush1.msra.mxu0 %v251
    %321 = vmatprep.subr.mxu0 %v249
    %322 = vmatpush1.msra.mxu0 %v248
    %323 = vmatprep.subr.mxu0 %v246
    %324 = vmatpush1.msra.mxu0 %v245
    %325 = vmatprep.subr.mxu0 0.0
    %326 = vmatpush2.msra.mxu0 0.0
    %327 = vmatprep.subr.mxu0 0.0
    %328 = vmatpush2.msra.mxu0 0.0
    %329 = vmatprep.subr.mxu0 0.0
    %330 = vmatpush2.msra.mxu0 0.0
    %331 = vmatprep.subr.mxu0 0.0
    %332 = vmatpush2.msra.mxu0 0.0
    %333 = vmatprep.subr.mxu0 0.0
    %334 = vmatpush2.msra.mxu0 0.0
    %335 = vmatprep.subr.mxu0 0.0
    %336 = vmatpush2.msra.mxu0 0.0
    %337 = vmatprep.subr.mxu0 0.0
    %338 = vmatpush2.msra.mxu0 0.0
    %339 = vmatprep.subr.mxu0 0.0
    %340 = vmatpush2.msra.mxu0 0.0
    %341 = vmatprep.subr.mxu0 0.0
    %342 = vmatpush2.msra.mxu0 0.0
    %343 = vmatprep.subr.mxu0 0.0
    %344 = vmatpush2.msra.mxu0 0.0
    %345 = vmatprep.subr.mxu0 0.0
    %346 = vmatpush2.msra.mxu0 0.0
    %347 = vmatprep.subr.mxu0 0.0
    %348 = vmatpush2.msra.mxu0 0.0
    %349 = vmatprep.subr.mxu0 0.0
    %350 = vmatpush2.msra.mxu0 0.0
    %351 = vmatprep.subr.mxu0 0.0
    %352 = vmatpush2.msra.mxu0 0.0
    %353 = vmatprep.subr.mxu0 0.0
    %354 = vmatpush2.msra.mxu0 0.0
    %355 = vmatprep.subr.mxu0 0.0
    %356 = vmatpush2.msra.mxu0 0.0
    %357 = vmatprep.mubr.f32.mxu0 0.0
    %358 = vmatmul.mubr.f32.gmra.mxu0 %v75
    %v359 = vpop.f32.mrf.mxu0
    %v360 = vadd.f32 0.0, %v359
    %v361 = vpop.f32.mrf.mxu0
    %v362 = vadd.f32 0.0, %v361
    %363 = vdwg.mxu0
    %364 = vmatprep.subr.mxu0 0.0
    %365 = vmatpush1.msra.mxu0 %v292
    %366 = vmatprep.subr.mxu0 0.0
    %367 = vmatpush1.msra.mxu0 %v289
    %368 = vmatprep.subr.mxu0 0.0
    %369 = vmatpush1.msra.mxu0 %v286
    %370 = vmatprep.subr.mxu0 0.0
    %371 = vmatpush1.msra.mxu0 %v283
    %372 = vmatprep.subr.mxu0 0.0
    %373 = vmatpush1.msra.mxu0 %v280
    %374 = vmatprep.subr.mxu0 0.0
    %375 = vmatpush1.msra.mxu0 %v277
    %376 = vmatprep.subr.mxu0 0.0
    %377 = vmatpush1.msra.mxu0 %v274
    %378 = vmatprep.subr.mxu0 0.0
    %379 = vmatpush1.msra.mxu0 %v271
    %380 = vmatprep.subr.mxu0 0.0
    %381 = vmatpush1.msra.mxu0 %v268
    %382 = vmatprep.subr.mxu0 0.0
    %383 = vmatpush1.msra.mxu0 %v265
    %384 = vmatprep.subr.mxu0 0.0
    %385 = vmatpush1.msra.mxu0 %v262
    %386 = vmatprep.subr.mxu0 0.0
    %387 = vmatpush1.msra.mxu0 %v259
    %388 = vmatprep.subr.mxu0 0.0
    %389 = vmatpush1.msra.mxu0 %v256
    %390 = vmatprep.subr.mxu0 0.0
    %391 = vmatpush1.msra.mxu0 %v253
    %392 = vmatprep.subr.mxu0 0.0
    %393 = vmatpush1.msra.mxu0 %v250
    %394 = vmatprep.subr.mxu0 0.0
    %395 = vmatpush1.msra.mxu0 %v247
    %396 = vmatprep.subr.mxu0 0.0
    %397 = vmatpush2.msra.mxu0 0.0
    %398 = vmatprep.subr.mxu0 0.0
    %399 = vmatpush2.msra.mxu0 0.0
    %400 = vmatprep.subr.mxu0 0.0
    %401 = vmatpush2.msra.mxu0 0.0
    %402 = vmatprep.subr.mxu0 0.0
    %403 = vmatpush2.msra.mxu0 0.0
    %404 = vmatprep.subr.mxu0 0.0
    %405 = vmatpush2.msra.mxu0 0.0
    %406 = vmatprep.subr.mxu0 0.0
    %407 = vmatpush2.msra.mxu0 0.0
    %408 = vmatprep.subr.mxu0 0.0
    %409 = vmatpush2.msra.mxu0 0.0
    %410 = vmatprep.subr.mxu0 0.0
    %411 = vmatpush2.msra.mxu0 0.0
    %412 = vmatprep.subr.mxu0 0.0
    %413 = vmatpush2.msra.mxu0 0.0
    %414 = vmatprep.subr.mxu0 0.0
    %415 = vmatpush2.msra.mxu0 0.0
    %416 = vmatprep.subr.mxu0 0.0
    %417 = vmatpush2.msra.mxu0 0.0
    %418 = vmatprep.subr.mxu0 0.0
    %419 = vmatpush2.msra.mxu0 0.0
    %420 = vmatprep.subr.mxu0 0.0
    %421 = vmatpush2.msra.mxu0 0.0
    %422 = vmatprep.subr.mxu0 0.0
    %423 = vmatpush2.msra.mxu0 0.0
    %424 = vmatprep.subr.mxu0 0.0
    %425 = vmatpush2.msra.mxu0 0.0
    %426 = vmatprep.subr.mxu0 0.0
    %427 = vmatpush2.msra.mxu0 0.0
    %428 = vmatprep.mubr.f32.mxu0 0.0
    %429 = vmatmul.mubr.f32.gmra.mxu0 %v75
    %v430 = vpop.f32.mrf.mxu0
    %v431 = vadd.f32 0.0, %v430
    %v432 = vpop.f32.mrf.mxu0
    %433 = vdwg.mxu0
    %v434 = vadd.f32 %v171, %v360
    %v435 = vadd.f32 %v173, %v362
    %v436 = vxor.u32 %v434, 2147483648
    %v437 = vxor.u32 %v435, 2147483648
    %v438 = vmul.f32 %v436, 1.442695
    %v439 = vpow.pop %v438
    %v440 = vmul.f32 %v437, 1.442695
    %v441 = vpow.pop %v440
    %v442 = vadd.f32 %v439, 1.0
    %v443 = vadd.f32 %v441, 1.0
    %v444 = vrcp.pop %v442
    %v445 = vmul.f32 1.0, %v444
    %v446 = vrcp.pop %v443
    %v447 = vmul.f32 1.0, %v446
    %v448 = vld [vmem:[%s5] sm:$0x1]
    %v450 = vlaneseq
    %v451 = vshrl.u32 %v450, 7
    %v452 = vsub.s32 0, %v451
    %v453 = vrot.slane %v448, %v452
    %v455 = vadd.f32 %v431, %v453
    %v456 = vmul.f32 %v445, %v455
    %v457 = vadd.f32 %v242, %v456
    %v458 = vtanh.pop %v457
    %v459 = vsub.f32 %v75, %v458
    %v460 = vmul.f32 %v459, %v447
    %v461 = vadd.f32 %v460, %v458
    %462 = vst [vmem:[#allocation10] sm:$0xff] %v461
    // Predicated region
    $region42: #{tpu_custom_call.1} parent=1 // pred_check
      _
    $region43: #{tpu_custom_call.1} parent=1 // pred_check_branch
      %464 = sbr.rel (0) target = $region45
    $region44: #{tpu_custom_call.1} parent=1 // pred_region
      %s466 = ssub.s32 128, 128
      %467 = vsyncadd [#allocation4], %s466
      %s469 = sshll.u32 [#allocation10], 4
      %s470 = int_to_ptr.vmem [resolvable:$true] %s469
      %472 = dma.vmem_to_hbm [thread:$0]  %s470, 128, %s6, [#allocation4]
    $region45: #{tpu_custom_call.1} parent=1 // pred_fallthru
      _
    // Predicated region
    $region46: #{tpu_custom_call.1} parent=1 // pred_check
      _
    $region47: #{tpu_custom_call.1} parent=1 // pred_check_branch
      %474 = sbr.rel (0) target = $region49
    $region48: #{tpu_custom_call.1} parent=1 // pred_region
      %475 = dma.done [#allocation4], 128
    $region49: #{tpu_custom_call.1} parent=1 // pred_fallthru
      _
    %476 = vsyncpa [#allocation3], 1
    %477 = vsyncpa [#allocation6], 1
    %478 = vsyncpa [#allocation9], 1
    %479 = vsyncpa [#allocation4], 1

</llo_original>
